<compile_context>
chip_gen: v7x
topology: tpu7x:2x2x1
jax: 0.10.0
libtpu: 0.0.40
codegen_flags: <defaults>
</compile_context>

<pallas_src>
import jax
import jax.numpy as jnp
import numpy as np
from jax.experimental import pallas as pl
from jax.experimental.pallas import tpu as pltpu


# ------------------------------- Pallas kernel --------------------------------
def decoder_step_kernel(
    x_ref,       # (B, 1)           int32   token ids for this step       [per-step]
    enc2d_ref,   # (B*S, 2H)        float32 encoder outputs               [resident]
    h0_ref,      # (B, Hp)          float32 initial hidden, lane-padded   [resident]
    sa_ref,      # (3H+16+Vp, H)    bf16    [w_attn | b_attn,v_w | emb_table]
    sb_ref,      # (EP+3H+16, 3H)   bf16    [w_ih | w_hh | b_ih,b_hh]
    sc_ref,      # (3H+EP+16, Vp)   bf16    [w_fc | b_fc]
    pred_ref,    # out (B, Vp)      float32 logits for this step          [per-step]
    hout_ref,    # out (B, Hp)      float32 final hidden, lane-padded     [resident]
    hid_sc,      # scratch (B, H)   float32 hidden-state carry
):
    t = pl.program_id(0)
    B, H = hid_sc.shape
    BS, twoH = enc2d_ref.shape
    S = BS // B
    Vp = pred_ref.shape[-1]
    Hp = hout_ref.shape[-1]
    EP = H                           # packer pads the embedding width up to H
    f32, bf16 = jnp.float32, jnp.bfloat16

    @pl.when(t == 0)
    def _init():
        hid_sc[...] = h0_ref[:, :H]

    hid = hid_sc[...]                                    # (B, H) f32 carry
    hid_b = hid.astype(bf16)
    enc2d = enc2d_ref[...]                               # (B*S, 2H) f32
    enc2d_b = enc2d.astype(bf16)

    # ---- embedding lookup: vectorized one-hot gather on the MXU --------------
    # TODO(synk): dropout is identity (eval mode); training-mode RNG mask not done.
    ids = x_ref[...]                                     # (B, 1) int32
    iota = jax.lax.broadcasted_iota(jnp.int32, (B, Vp), 1)
    onehot = jnp.where(iota == ids, 1.0, 0.0).astype(bf16)           # (B, Vp)
    embt = sa_ref[3 * H + 16:, :]                        # (Vp, EP) bf16
    emb = jnp.dot(onehot, embt, preferred_element_type=f32)          # (B, EP) f32

    # ---- attention ------------------------------------------------------------
    w_attn_h = sa_ref[0:H, :]                            # (H, H)   bf16
    w_attn_e = sa_ref[H:3 * H, :]                        # (2H, H)  bf16
    misc = sa_ref[3 * H:3 * H + 2, :].astype(f32)        # (2, H)
    b_attn = misc[0:1, :]
    v_w = misc[1:2, :]

    e_h = jnp.dot(hid_b, w_attn_h, preferred_element_type=f32)       # (B, H)
    e_e = jnp.dot(enc2d_b, w_attn_e, preferred_element_type=f32)     # (B*S, H)
    energy = jnp.tanh(e_e.reshape(B, S, H) + e_h[:, None, :] + b_attn[None, :, :])

    scores = jnp.sum(energy * v_w[None, :, :], axis=-1)              # (B, S)
    m = jnp.max(scores, axis=-1, keepdims=True)
    p = jnp.exp(scores - m)
    attn = p * pl.reciprocal(jnp.sum(p, axis=-1, keepdims=True), approx=False)

    # weighted = bmm(attn, enc_out): VPU multiply + XLU sublane reduce (f32)
    weighted = jnp.sum(attn[:, :, None] * enc2d.reshape(B, S, twoH), axis=1)   # (B, 2H)

    # ---- GRU single step (PyTorch gate order: r, z, n) ------------------------
    w_ih = sb_ref[0:EP + twoH, :]                        # (EP+2H, 3H) bf16
    w_hh = sb_ref[EP + twoH:EP + twoH + H, :]            # (H, 3H)     bf16
    gb = sb_ref[EP + twoH + H:EP + twoH + H + 2, :].astype(f32)
    b_ih = gb[0:1, :]
    b_hh = gb[1:2, :]

    rnn_in = jnp.concatenate([emb, weighted], axis=1).astype(bf16)   # (B, EP+2H)
    gi = jnp.dot(rnn_in, w_ih, preferred_element_type=f32) + b_ih    # (B, 3H)
    gh = jnp.dot(hid_b, w_hh, preferred_element_type=f32) + b_hh     # (B, 3H)

    r = jax.nn.sigmoid(gi[:, 0:H] + gh[:, 0:H])
    z = jax.nn.sigmoid(gi[:, H:2 * H] + gh[:, H:2 * H])
    n = jnp.tanh(gi[:, 2 * H:] + r * gh[:, 2 * H:])
    h_new = (1.0 - z) * n + z * hid                                  # (B, H) f32

    # ---- fc_out(cat([out, weighted, embedded])): one lane-dense matmul --------
    w_fc = sc_ref[0:3 * H + EP, :]                       # (3H+EP, Vp) bf16
    b_fc = sc_ref[3 * H + EP:3 * H + EP + 2, :].astype(f32)[0:1, :]  # (1, Vp)
    pred_in = jnp.concatenate([h_new, weighted, emb], axis=1).astype(bf16)  # (B, 3H+EP)
    pred = jnp.dot(pred_in, w_fc, preferred_element_type=f32) + b_fc        # (B, Vp)

    pred_ref[...] = pred
    hid_sc[...] = h_new
    hout_ref[...] = jnp.concatenate([h_new, jnp.zeros((B, Hp - H), f32)], axis=1)


# ------------------------- Parameter packing (one-time) -----------------------
def pack_decoder_params(params, lane_vocab=128, hp=128):
    """Pack/pad the raw per-layer params into three lane-grouped bf16 slabs."""
    V, E = params['emb_table'].shape
    H = params['w_attn_h'].shape[0]
    assert E <= H, "packer assumes emb_dim <= hidden_dim"
    Vp = ((V + lane_vocab - 1) // lane_vocab) * lane_vocab
    EP = H
    bf = jnp.bfloat16

    # slab A (lane width H): [ w_attn (3H) | b_attn, v_w (+pad to 16) | emb_table (Vp) ]
    misc = jnp.concatenate(
        [params['b_attn'], params['v_w'], jnp.zeros((14, H), jnp.float32)], axis=0)
    embt = jnp.pad(params['emb_table'], ((0, Vp - V), (0, EP - E)))
    slab_a = jnp.concatenate(
        [params['w_attn_h'], params['w_attn_e'], misc, embt], axis=0).astype(bf)

    # slab B (lane width 3H): [ w_ih (EP+2H) | w_hh (H) | b_ih, b_hh (+pad to 16) ]
    w_ih_e = jnp.pad(params['w_ih_e'], ((0, EP - E), (0, 0)))
    gbias = jnp.concatenate(
        [params['b_ih'], params['b_hh'], jnp.zeros((14, 3 * H), jnp.float32)], axis=0)
    slab_b = jnp.concatenate(
        [w_ih_e, params['w_ih_w'], params['w_hh'], gbias], axis=0).astype(bf)

    # slab C (lane width Vp): [ w_fc (3H+EP) | b_fc (+pad to 16) ]
    w_fc_e = jnp.pad(params['w_fc_e'], ((0, EP - E), (0, 0)))
    fcb = jnp.concatenate([params['b_fc'], jnp.zeros((15, V), jnp.float32)], axis=0)
    slab_c = jnp.pad(
        jnp.concatenate([params['w_fc_h'], params['w_fc_w'], w_fc_e, fcb], axis=0),
        ((0, 0), (0, Vp - V))).astype(bf)

    meta = {'V': V, 'Vp': Vp, 'H': H, 'E': E, 'EP': EP, 'Hp': hp}
    return {'slab_a': slab_a, 'slab_b': slab_b, 'slab_c': slab_c}, meta


# ------------------------------- Wrappers --------------------------------------
def decoder_forward_steps(x_seq, enc_out, hidden, packed, meta):
    """Fused multi-step decode. x_seq: (T, B) int32; enc_out: (B,S,2H); hidden: (B,H).
    Each grid step is exactly one Decoder.forward; returns (preds (T,B,V), h (B,H))."""
    T, B = x_seq.shape
    _, S, twoH = enc_out.shape
    H = hidden.shape[-1]
    V, Vp, Hp = meta['V'], meta['Vp'], meta['Hp']

    enc2d = enc_out.reshape(B * S, twoH).astype(jnp.float32)   # lane-dense 2-D slab
    x3 = x_seq.reshape(T, B, 1).astype(jnp.int32)
    h0p = jnp.pad(hidden.astype(jnp.float32), ((0, 0), (0, Hp - H)))

    preds_pad, h_out = pl.pallas_call(
        decoder_step_kernel,
        grid=(T,),
        out_shape=(
            jax.ShapeDtypeStruct((T, B, Vp), jnp.float32),
            jax.ShapeDtypeStruct((B, Hp), jnp.float32),
        ),
        in_specs=[
            pl.BlockSpec((None, B, 1), lambda t: (t, 0, 0)),    # token ids (per step)
            pl.BlockSpec((B * S, twoH), lambda t: (0, 0)),      # enc_out   (resident)
            pl.BlockSpec((B, Hp), lambda t: (0, 0)),            # hidden0   (resident)
            pl.BlockSpec(packed['slab_a'].shape, lambda t: (0, 0)),
            pl.BlockSpec(packed['slab_b'].shape, lambda t: (0, 0)),
            pl.BlockSpec(packed['slab_c'].shape, lambda t: (0, 0)),
        ],
        out_specs=(
            pl.BlockSpec((None, B, Vp), lambda t: (t, 0, 0)),   # per-step logits
            pl.BlockSpec((B, Hp), lambda t: (0, 0)),            # final hidden (resident)
        ),
        scratch_shapes=[pltpu.VMEM((B, H), jnp.float32)],
        input_output_aliases={2: 1},      # hidden state buffer updated in place
        compiler_params=pltpu.CompilerParams(dimension_semantics=("arbitrary",)),
    )(x3, enc2d, h0p, packed['slab_a'], packed['slab_b'], packed['slab_c'])

    return preds_pad[:, :, :V], h_out[:, :H]


def decoder_forward(x, enc_out, hidden, packed, meta):
    """Single Decoder.forward step (matches the PyTorch module signature)."""
    preds, h_new = decoder_forward_steps(x[None, :], enc_out, hidden, packed, meta)
    return preds[0], h_new


# ----------------------- Pure-JAX references (for checking) --------------------
def decoder_reference(x, enc_out, hidden, params, mxu_bf16=True):
    """One decode step. With mxu_bf16=True it mirrors the kernel's numerics (bf16
    operands into the MXU, f32 accumulation and elementwise); False = pure f32."""
    B, S, twoH = enc_out.shape
    H = hidden.shape[-1]
    cdt = jnp.bfloat16 if mxu_bf16 else jnp.float32

    def mm(a, w):
        return jnp.dot(a.astype(cdt), w.astype(cdt), preferred_element_type=jnp.float32)

    def cst(w):   # constants as the kernel sees them (bf16-rounded)
        return w.astype(cdt).astype(jnp.float32)

    embedded = cst(jnp.take(params['emb_table'], x, axis=0))            # (B, E)

    # attention
    e_h = mm(hidden, params['w_attn_h'])                                # (B, H)
    e_e = mm(enc_out.reshape(B * S, twoH), params['w_attn_e']).reshape(B, S, H)
    energy = jnp.tanh(e_e + e_h[:, None, :] + cst(params['b_attn'])[None])
    scores = jnp.sum(energy * cst(params['v_w'])[None], axis=-1)        # (B, S)
    m = jnp.max(scores, axis=-1, keepdims=True)
    p = jnp.exp(scores - m)
    attn = p / jnp.sum(p, axis=-1, keepdims=True)
    weighted = jnp.einsum('bs,bsd->bd', attn, enc_out)                  # (B, 2H)

    # GRU step (gate order r, z, n)
    w_ih = jnp.concatenate([params['w_ih_e'], params['w_ih_w']], axis=0)
    rnn_in = jnp.concatenate([embedded, weighted], axis=1)
    gi = mm(rnn_in, w_ih) + cst(params['b_ih'])[0]
    gh = mm(hidden, params['w_hh']) + cst(params['b_hh'])[0]
    r = jax.nn.sigmoid(gi[:, :H] + gh[:, :H])
    z = jax.nn.sigmoid(gi[:, H:2 * H] + gh[:, H:2 * H])
    n = jnp.tanh(gi[:, 2 * H:] + r * gh[:, 2 * H:])
    h_new = (1.0 - z) * n + z * hidden

    w_fc = jnp.concatenate([params['w_fc_h'], params['w_fc_w'], params['w_fc_e']], axis=0)
    pred_in = jnp.concatenate([h_new, weighted, embedded], axis=1)
    pred = mm(pred_in, w_fc) + cst(params['b_fc'])[0]
    return pred, h_new


def decoder_reference_steps(x_seq, enc_out, hidden, params, mxu_bf16=True):
    preds, h = [], hidden
    for t in range(x_seq.shape[0]):
        p, h = decoder_reference(x_seq[t], enc_out, h, params, mxu_bf16=mxu_bf16)
        preds.append(p)
    return jnp.stack(preds, axis=0), h


# --------------------------------- Main ---------------------------------------
if __name__ == "__main__":
    B, S, H, E, V, T = 2, 8, 32, 16, 20, 4   # batch, src-seq, hidden, emb, vocab, steps

    key = jax.random.PRNGKey(0)
    ks = jax.random.split(key, 17)

    def init(k, shape, scale=0.1):
        return (scale * jax.random.normal(k, shape)).astype(jnp.float32)

    params = {
        'emb_table': init(ks[0], (V, E)),
        # attention: Linear(3H -> H) stored transposed, split [hidden | enc]
        'w_attn_h': init(ks[1], (H, H)),
        'w_attn_e': init(ks[2], (2 * H, H)),
        'b_attn':   init(ks[3], (1, H)),
        'v_w':      init(ks[4], (1, H)),      # Linear(H -> 1, bias=False)
        # GRU: W_ih (E+2H -> 3H) transposed, split [embedded | weighted]; gate order r,z,n
        'w_ih_e':   init(ks[5], (E, 3 * H)),
        'w_ih_w':   init(ks[6], (2 * H, 3 * H)),
        'w_hh':     init(ks[7], (H, 3 * H)),
        'b_ih':     init(ks[8], (1, 3 * H)),
        'b_hh':     init(ks[9], (1, 3 * H)),
        # fc_out: Linear(3H+E -> V) transposed, split [out | weighted | embedded]
        'w_fc_h':   init(ks[10], (H, V)),
        'w_fc_w':   init(ks[11], (2 * H, V)),
        'w_fc_e':   init(ks[12], (E, V)),
        'b_fc':     init(ks[13], (1, V)),
    }

    x_seq = jax.random.randint(ks[14], (T, B), 0, V, dtype=jnp.int32)
    enc_out = init(ks[15], (B, S, 2 * H), scale=1.0)
    hidden = init(ks[16], (B, H), scale=1.0)

    # One-time parameter packing (outside the per-step path).
    packed, meta = pack_decoder_params(params)
    packed = jax.tree_util.tree_map(jax.block_until_ready, packed)

    # Fused multi-step decode: weights / enc_out stay VMEM-resident for all T steps.
    preds, h_last = decoder_forward_steps(x_seq, enc_out, hidden, packed, meta)
    jax.block_until_ready((preds, h_last))

    # Single-step path (original module forward signature).
    pred0, h0 = decoder_forward(x_seq[0], enc_out, hidden, packed, meta)
    jax.block_until_ready((pred0, h0))

    # Strict check vs. a reference that mirrors the kernel's bf16-MXU numerics.
    preds_ref, h_ref = decoder_reference_steps(x_seq, enc_out, hidden, params, mxu_bf16=True)
    np.testing.assert_allclose(np.asarray(preds), np.asarray(preds_ref), rtol=2e-3, atol=2e-3)
    np.testing.assert_allclose(np.asarray(h_last), np.asarray(h_ref), rtol=2e-3, atol=2e-3)
    p1_ref, h1_ref = decoder_reference(x_seq[0], enc_out, hidden, params, mxu_bf16=True)
    np.testing.assert_allclose(np.asarray(pred0), np.asarray(p1_ref), rtol=2e-3, atol=2e-3)
    np.testing.assert_allclose(np.asarray(h0), np.asarray(h1_ref), rtol=2e-3, atol=2e-3)

    # Loose sanity check vs. the pure-f32 reference (documents bf16 weight effect).
    preds_f32, h_f32 = decoder_reference_steps(x_seq, enc_out, hidden, params, mxu_bf16=False)
    np.testing.assert_allclose(np.asarray(preds), np.asarray(preds_f32), rtol=5e-2, atol=5e-2)
    np.testing.assert_allclose(np.asarray(h_last), np.asarray(h_f32), rtol=5e-2, atol=5e-2)

    print("KERNEL_OK")
</pallas_src>

<mosaic_0001>
module attributes {stable_mosaic.version = 11 : i64} {
  func.func @decoder_step_kernel(%arg0: i32, %arg1: memref<1x2x1xi32, #tpu.memory_space<vmem>>, %arg2: memref<16x64xf32, #tpu.memory_space<vmem>>, %arg3: memref<2x128xf32, #tpu.memory_space<vmem>>, %arg4: memref<240x32xbf16, #tpu.memory_space<vmem>>, %arg5: memref<144x96xbf16, #tpu.memory_space<vmem>>, %arg6: memref<144x128xbf16, #tpu.memory_space<vmem>>, %arg7: memref<1x2x128xf32, #tpu.memory_space<vmem>>, %arg8: memref<2x128xf32, #tpu.memory_space<vmem>>, %arg9: memref<2x32xf32, #tpu.memory_space<vmem>>) attributes {dimension_semantics = [#tpu.dimension_semantics<arbitrary>], iteration_bounds = array<i64: 4>, scalar_prefetch = 0 : i64, scratch_operands = 1 : i64, tpu.core_type = #tpu.core_type<tc>, window_params = [{transform_indices = @transform_0, window_bounds = array<i64: 1, 2, 1>}, {pipeline_mode = #tpu.pipeline_mode<synchronous>, transform_indices = @transform_1, window_bounds = array<i64: 16, 64>}, {pipeline_mode = #tpu.pipeline_mode<synchronous>, transform_indices = @transform_2, window_bounds = array<i64: 2, 128>}, {pipeline_mode = #tpu.pipeline_mode<synchronous>, transform_indices = @transform_3, window_bounds = array<i64: 240, 32>}, {pipeline_mode = #tpu.pipeline_mode<synchronous>, transform_indices = @transform_4, window_bounds = array<i64: 144, 96>}, {pipeline_mode = #tpu.pipeline_mode<synchronous>, transform_indices = @transform_5, window_bounds = array<i64: 144, 128>}, {transform_indices = @transform_6, window_bounds = array<i64: 1, 2, 128>}, {pipeline_mode = #tpu.pipeline_mode<synchronous>, transform_indices = @transform_7, window_bounds = array<i64: 2, 128>}]} {
    %c0_i32 = arith.constant 0 : i32
    %0 = arith.cmpi eq, %arg0, %c0_i32 : i32
    %1 = arith.extui %0 : i1 to i32
    %c0_i32_0 = arith.constant 0 : i32
    %2 = arith.cmpi ne, %1, %c0_i32_0 : i32
    scf.if %2 {
      %c0_43 = arith.constant 0 : index
      %c0_44 = arith.constant 0 : index
      %109 = vector.load %arg3[%c0_43, %c0_44] : memref<2x128xf32, #tpu.memory_space<vmem>>, vector<2x32xf32>
      %c0_45 = arith.constant 0 : index
      %c0_46 = arith.constant 0 : index
      %110 = vector.load %arg9[%c0_45, %c0_46] : memref<2x32xf32, #tpu.memory_space<vmem>>, vector<2x32xf32>
      tpu.vector_store %arg9[%c0_45, %c0_46], %109 {strides = array<i32>} : memref<2x32xf32, #tpu.memory_space<vmem>>, vector<2x32xf32>,
    } else {
    }
    %c0 = arith.constant 0 : index
    %c0_1 = arith.constant 0 : index
    %3 = vector.load %arg9[%c0, %c0_1] : memref<2x32xf32, #tpu.memory_space<vmem>>, vector<2x32xf32>
    %4 = arith.truncf %3 : vector<2x32xf32> to vector<2x32xbf16>
    %c0_2 = arith.constant 0 : index
    %c0_3 = arith.constant 0 : index
    %5 = vector.load %arg2[%c0_2, %c0_3] : memref<16x64xf32, #tpu.memory_space<vmem>>, vector<16x64xf32>
    %6 = arith.truncf %5 : vector<16x64xf32> to vector<16x64xbf16>
    %c0_4 = arith.constant 0 : index
    %c0_5 = arith.constant 0 : index
    %c0_6 = arith.constant 0 : index
    %7 = vector.load %arg1[%c0_4, %c0_5, %c0_6] : memref<1x2x1xi32, #tpu.memory_space<vmem>>, vector<1x2x1xi32>
    %8 = vector.shape_cast %7 : vector<1x2x1xi32> to vector<2x1xi32>
    %9 = tpu.iota {dimensions = array<i32: 1>} : vector<2x128xi32>
    %10 = vector.broadcast %8 : vector<2x1xi32> to vector<2x128xi32>
    %11 = arith.cmpi eq, %9, %10 : vector<2x128xi32>
    %cst = arith.constant 1.000000e+00 : f32
    %cst_7 = arith.constant 0.000000e+00 : f32
    %12 = vector.broadcast %cst : f32 to vector<2x128xf32>
    %13 = vector.broadcast %cst_7 : f32 to vector<2x128xf32>
    %14 = arith.select %11, %12, %13 : vector<2x128xi1>, vector<2x128xf32>
    %15 = arith.truncf %14 : vector<2x128xf32> to vector<2x128xbf16>
    %c112 = arith.constant 112 : index
    %c0_8 = arith.constant 0 : index
    %16 = vector.load %arg4[%c112, %c0_8] : memref<240x32xbf16, #tpu.memory_space<vmem>>, vector<128x32xbf16>
    %cst_9 = arith.constant dense<0.000000e+00> : vector<2x32xf32>
    %17 = tpu.matmul %15, %16, %cst_9 {dimension_numbers = #tpu.dot_dimension_numbers<[1], [0], [0], [1], [0, 0, 1, 1], [], []>} : vector<2x128xbf16>, vector<128x32xbf16>, vector<2x32xf32> -> vector<2x32xf32>
    %c0_10 = arith.constant 0 : index
    %c0_11 = arith.constant 0 : index
    %18 = vector.load %arg4[%c0_10, %c0_11] : memref<240x32xbf16, #tpu.memory_space<vmem>>, vector<32x32xbf16>
    %c32 = arith.constant 32 : index
    %c0_12 = arith.constant 0 : index
    %19 = vector.load %arg4[%c32, %c0_12] : memref<240x32xbf16, #tpu.memory_space<vmem>>, vector<64x32xbf16>
    %c96 = arith.constant 96 : index
    %c0_13 = arith.constant 0 : index
    %20 = vector.load %arg4[%c96, %c0_13] : memref<240x32xbf16, #tpu.memory_space<vmem>>, vector<2x32xbf16>
    %21 = arith.extf %20 : vector<2x32xbf16> to vector<2x32xf32>
    %22 = vector.extract_strided_slice %21 {offsets = [0, 0], sizes = [1, 32], strides = [1, 1]} : vector<2x32xf32> to vector<1x32xf32>
    %23 = vector.extract_strided_slice %21 {offsets = [1, 0], sizes = [1, 32], strides = [1, 1]} : vector<2x32xf32> to vector<1x32xf32>
    %cst_14 = arith.constant dense<0.000000e+00> : vector<2x32xf32>
    %24 = tpu.matmul %4, %18, %cst_14 {dimension_numbers = #tpu.dot_dimension_numbers<[1], [0], [0], [1], [0, 0, 1, 1], [], []>} : vector<2x32xbf16>, vector<32x32xbf16>, vector<2x32xf32> -> vector<2x32xf32>
    %cst_15 = arith.constant dense<0.000000e+00> : vector<16x32xf32>
    %25 = tpu.matmul %6, %19, %cst_15 {dimension_numbers = #tpu.dot_dimension_numbers<[1], [0], [0], [1], [0, 0, 1, 1], [], []>} : vector<16x64xbf16>, vector<64x32xbf16>, vector<16x32xf32> -> vector<16x32xf32>
    %26 = vector.shape_cast %25 : vector<16x32xf32> to vector<2x8x32xf32>
    %27 = vector.shape_cast %24 : vector<2x32xf32> to vector<2x1x32xf32>
    %28 = vector.broadcast %27 : vector<2x1x32xf32> to vector<2x8x32xf32>
    %29 = arith.addf %26, %28 : vector<2x8x32xf32>
    %30 = vector.shape_cast %22 : vector<1x32xf32> to vector<1x1x32xf32>
    %31 = vector.broadcast %30 : vector<1x1x32xf32> to vector<2x8x32xf32>
    %32 = arith.addf %29, %31 : vector<2x8x32xf32>
    %33 = math.tanh %32 : vector<2x8x32xf32>
    %34 = vector.shape_cast %23 : vector<1x32xf32> to vector<1x1x32xf32>
    %35 = vector.broadcast %34 : vector<1x1x32xf32> to vector<2x8x32xf32>
    %36 = arith.mulf %33, %35 : vector<2x8x32xf32>
    %cst_16 = arith.constant dense<0.000000e+00> : vector<2x8xf32>
    %37 = vector.multi_reduction <add>, %36, %cst_16 [2] : vector<2x8x32xf32> to vector<2x8xf32>
    %cst_17 = arith.constant dense<0xFF800000> : vector<2xf32>
    %38 = vector.multi_reduction <maximumf>, %37, %cst_17 [1] : vector<2x8xf32> to vector<2xf32>
    %39 = vector.shape_cast %38 : vector<2xf32> to vector<2x1xf32>
    %40 = vector.broadcast %39 : vector<2x1xf32> to vector<2x8xf32>
    %41 = arith.subf %37, %40 : vector<2x8xf32>
    %42 = math.exp %41 : vector<2x8xf32>
    %cst_18 = arith.constant dense<0.000000e+00> : vector<2xf32>
    %43 = vector.multi_reduction <add>, %42, %cst_18 [1] : vector<2x8xf32> to vector<2xf32>
    %44 = vector.shape_cast %43 : vector<2xf32> to vector<2x1xf32>
    %45 = tpu.reciprocal %44 : vector<2x1xf32> -> vector<2x1xf32>
    %46 = vector.broadcast %45 : vector<2x1xf32> to vector<2x8xf32>
    %47 = arith.mulf %42, %46 : vector<2x8xf32>
    %48 = vector.shape_cast %47 : vector<2x8xf32> to vector<2x8x1xf32>
    %49 = vector.shape_cast %5 : vector<16x64xf32> to vector<2x8x64xf32>
    %50 = vector.broadcast %48 : vector<2x8x1xf32> to vector<2x8x64xf32>
    %51 = arith.mulf %50, %49 : vector<2x8x64xf32>
    %cst_19 = arith.constant dense<0.000000e+00> : vector<2x64xf32>
    %52 = vector.multi_reduction <add>, %51, %cst_19 [1] : vector<2x8x64xf32> to vector<2x64xf32>
    %c0_20 = arith.constant 0 : index
    %c0_21 = arith.constant 0 : index
    %53 = vector.load %arg5[%c0_20, %c0_21] : memref<144x96xbf16, #tpu.memory_space<vmem>>, vector<96x96xbf16>
    %c96_22 = arith.constant 96 : index
    %c0_23 = arith.constant 0 : index
    %54 = vector.load %arg5[%c96_22, %c0_23] : memref<144x96xbf16, #tpu.memory_space<vmem>>, vector<32x96xbf16>
    %c128 = arith.constant 128 : index
    %c0_24 = arith.constant 0 : index
    %55 = vector.load %arg5[%c128, %c0_24] : memref<144x96xbf16, #tpu.memory_space<vmem>>, vector<2x96xbf16>
    %56 = arith.extf %55 : vector<2x96xbf16> to vector<2x96xf32>
    %57 = vector.extract_strided_slice %56 {offsets = [0, 0], sizes = [1, 96], strides = [1, 1]} : vector<2x96xf32> to vector<1x96xf32>
    %58 = vector.extract_strided_slice %56 {offsets = [1, 0], sizes = [1, 96], strides = [1, 1]} : vector<2x96xf32> to vector<1x96xf32>
    %59 = tpu.concatenate %17, %52 in 1 : vector<2x32xf32>, vector<2x64xf32> -> vector<2x96xf32>
    %60 = arith.truncf %59 : vector<2x96xf32> to vector<2x96xbf16>
    %cst_25 = arith.constant dense<0.000000e+00> : vector<2x96xf32>
    %61 = tpu.matmul %60, %53, %cst_25 {dimension_numbers = #tpu.dot_dimension_numbers<[1], [0], [0], [1], [0, 0, 1, 1], [], []>} : vector<2x96xbf16>, vector<96x96xbf16>, vector<2x96xf32> -> vector<2x96xf32>
    %62 = vector.broadcast %57 : vector<1x96xf32> to vector<2x96xf32>
    %63 = arith.addf %61, %62 : vector<2x96xf32>
    %cst_26 = arith.constant dense<0.000000e+00> : vector<2x96xf32>
    %64 = tpu.matmul %4, %54, %cst_26 {dimension_numbers = #tpu.dot_dimension_numbers<[1], [0], [0], [1], [0, 0, 1, 1], [], []>} : vector<2x32xbf16>, vector<32x96xbf16>, vector<2x96xf32> -> vector<2x96xf32>
    %65 = vector.broadcast %58 : vector<1x96xf32> to vector<2x96xf32>
    %66 = arith.addf %64, %65 : vector<2x96xf32>
    %67 = vector.extract_strided_slice %63 {offsets = [0, 0], sizes = [2, 32], strides = [1, 1]} : vector<2x96xf32> to vector<2x32xf32>
    %68 = vector.extract_strided_slice %66 {offsets = [0, 0], sizes = [2, 32], strides = [1, 1]} : vector<2x96xf32> to vector<2x32xf32>
    %69 = arith.addf %67, %68 : vector<2x32xf32>
    %70 = arith.negf %69 : vector<2x32xf32>
    %71 = math.exp %70 : vector<2x32xf32>
    %cst_27 = arith.constant 1.000000e+00 : f32
    %72 = vector.broadcast %cst_27 : f32 to vector<2x32xf32>
    %73 = arith.addf %72, %71 : vector<2x32xf32>
    %74 = arith.divf %72, %73 : vector<2x32xf32>
    %75 = vector.extract_strided_slice %63 {offsets = [0, 32], sizes = [2, 32], strides = [1, 1]} : vector<2x96xf32> to vector<2x32xf32>
    %76 = vector.extract_strided_slice %66 {offsets = [0, 32], sizes = [2, 32], strides = [1, 1]} : vector<2x96xf32> to vector<2x32xf32>
    %77 = arith.addf %75, %76 : vector<2x32xf32>
    %78 = arith.negf %77 : vector<2x32xf32>
    %79 = math.exp %78 : vector<2x32xf32>
    %cst_28 = arith.constant 1.000000e+00 : f32
    %80 = vector.broadcast %cst_28 : f32 to vector<2x32xf32>
    %81 = arith.addf %80, %79 : vector<2x32xf32>
    %82 = arith.divf %80, %81 : vector<2x32xf32>
    %83 = vector.extract_strided_slice %63 {offsets = [0, 64], sizes = [2, 32], strides = [1, 1]} : vector<2x96xf32> to vector<2x32xf32>
    %84 = vector.extract_strided_slice %66 {offsets = [0, 64], sizes = [2, 32], strides = [1, 1]} : vector<2x96xf32> to vector<2x32xf32>
    %85 = arith.mulf %74, %84 : vector<2x32xf32>
    %86 = arith.addf %83, %85 : vector<2x32xf32>
    %87 = math.tanh %86 : vector<2x32xf32>
    %cst_29 = arith.constant 1.000000e+00 : f32
    %88 = vector.broadcast %cst_29 : f32 to vector<2x32xf32>
    %89 = arith.subf %88, %82 : vector<2x32xf32>
    %90 = arith.mulf %89, %87 : vector<2x32xf32>
    %91 = arith.mulf %82, %3 : vector<2x32xf32>
    %92 = arith.addf %90, %91 : vector<2x32xf32>
    %c0_30 = arith.constant 0 : index
    %c0_31 = arith.constant 0 : index
    %93 = vector.load %arg6[%c0_30, %c0_31] : memref<144x128xbf16, #tpu.memory_space<vmem>>, vector<128x128xbf16>
    %c128_32 = arith.constant 128 : index
    %c0_33 = arith.constant 0 : index
    %94 = vector.load %arg6[%c128_32, %c0_33] : memref<144x128xbf16, #tpu.memory_space<vmem>>, vector<2x128xbf16>
    %95 = arith.extf %94 : vector<2x128xbf16> to vector<2x128xf32>
    %96 = vector.extract_strided_slice %95 {offsets = [0, 0], sizes = [1, 128], strides = [1, 1]} : vector<2x128xf32> to vector<1x128xf32>
    %97 = tpu.concatenate %92, %52, %17 in 1 : vector<2x32xf32>, vector<2x64xf32>, vector<2x32xf32> -> vector<2x128xf32>
    %98 = arith.truncf %97 : vector<2x128xf32> to vector<2x128xbf16>
    %cst_34 = arith.constant dense<0.000000e+00> : vector<2x128xf32>
    %99 = tpu.matmul %98, %93, %cst_34 {dimension_numbers = #tpu.dot_dimension_numbers<[1], [0], [0], [1], [0, 0, 1, 1], [], []>} : vector<2x128xbf16>, vector<128x128xbf16>, vector<2x128xf32> -> vector<2x128xf32>
    %100 = vector.broadcast %96 : vector<1x128xf32> to vector<2x128xf32>
    %101 = arith.addf %99, %100 : vector<2x128xf32>
    %c0_35 = arith.constant 0 : index
    %c0_36 = arith.constant 0 : index
    %c0_37 = arith.constant 0 : index
    %102 = vector.load %arg7[%c0_35, %c0_36, %c0_37] : memref<1x2x128xf32, #tpu.memory_space<vmem>>, vector<1x2x128xf32>
    %103 = vector.shape_cast %102 : vector<1x2x128xf32> to vector<2x128xf32>
    %104 = vector.shape_cast %101 : vector<2x128xf32> to vector<1x2x128xf32>
    tpu.vector_store %arg7[%c0_35, %c0_36, %c0_37], %104 {strides = array<i32>} : memref<1x2x128xf32, #tpu.memory_space<vmem>>, vector<1x2x128xf32>,
    %c0_38 = arith.constant 0 : index
    %c0_39 = arith.constant 0 : index
    %105 = vector.load %arg9[%c0_38, %c0_39] : memref<2x32xf32, #tpu.memory_space<vmem>>, vector<2x32xf32>
    tpu.vector_store %arg9[%c0_38, %c0_39], %92 {strides = array<i32>} : memref<2x32xf32, #tpu.memory_space<vmem>>, vector<2x32xf32>,
    %cst_40 = arith.constant 0.000000e+00 : f32
    %106 = vector.broadcast %cst_40 : f32 to vector<2x96xf32>
    %107 = tpu.concatenate %92, %106 in 1 : vector<2x32xf32>, vector<2x96xf32> -> vector<2x128xf32>
    %c0_41 = arith.constant 0 : index
    %c0_42 = arith.constant 0 : index
    %108 = vector.load %arg8[%c0_41, %c0_42] : memref<2x128xf32, #tpu.memory_space<vmem>>, vector<2x128xf32>
    tpu.vector_store %arg8[%c0_41, %c0_42], %107 {strides = array<i32>} : memref<2x128xf32, #tpu.memory_space<vmem>>, vector<2x128xf32>,
    return
  }
  func.func @transform_0(%arg0: i32) -> (i32, i32, i32) {
    %c0_i32 = arith.constant 0 : i32
    %c0_i32_0 = arith.constant 0 : i32
    %c0_i32_1 = arith.constant 0 : i32
    return %arg0, %c0_i32, %c0_i32_0 : i32, i32, i32
  }
  func.func @transform_1(%arg0: i32) -> (i32, i32) {
    %c0_i32 = arith.constant 0 : i32
    %c0_i32_0 = arith.constant 0 : i32
    %c0_i32_1 = arith.constant 0 : i32
    return %c0_i32, %c0_i32_0 : i32, i32
  }
  func.func @transform_2(%arg0: i32) -> (i32, i32) {
    %c0_i32 = arith.constant 0 : i32
    %c0_i32_0 = arith.constant 0 : i32
    %c0_i32_1 = arith.constant 0 : i32
    return %c0_i32, %c0_i32_0 : i32, i32
  }
  func.func @transform_3(%arg0: i32) -> (i32, i32) {
    %c0_i32 = arith.constant 0 : i32
    %c0_i32_0 = arith.constant 0 : i32
    %c0_i32_1 = arith.constant 0 : i32
    return %c0_i32, %c0_i32_0 : i32, i32
  }
  func.func @transform_4(%arg0: i32) -> (i32, i32) {
    %c0_i32 = arith.constant 0 : i32
    %c0_i32_0 = arith.constant 0 : i32
    %c0_i32_1 = arith.constant 0 : i32
    return %c0_i32, %c0_i32_0 : i32, i32
  }
  func.func @transform_5(%arg0: i32) -> (i32, i32) {
    %c0_i32 = arith.constant 0 : i32
    %c0_i32_0 = arith.constant 0 : i32
    %c0_i32_1 = arith.constant 0 : i32
    return %c0_i32, %c0_i32_0 : i32, i32
  }
  func.func @transform_6(%arg0: i32) -> (i32, i32, i32) {
    %c0_i32 = arith.constant 0 : i32
    %c0_i32_0 = arith.constant 0 : i32
    %c0_i32_1 = arith.constant 0 : i32
    return %arg0, %c0_i32, %c0_i32_0 : i32, i32, i32
  }
  func.func @transform_7(%arg0: i32) -> (i32, i32) {
    %c0_i32 = arith.constant 0 : i32
    %c0_i32_0 = arith.constant 0 : i32
    %c0_i32_1 = arith.constant 0 : i32
    return %c0_i32, %c0_i32_0 : i32, i32
  }
}

</mosaic_0001>

<llo_original>
// kernel: tpu_custom_call.1
$region0: #{tpu_custom_call.1}
  #allocation0 [shape = 'u32[]', space=smem, size = 0x4, offset = 0x4, fixed_abs, tag = 'smem constant byte address 0x4 - core index']
  #allocation1 [shape = 'u32[144,128]{1,0:T(1,128)}', space=vmem, size = 0x12000, scoped, tag = 'internal scratch']
  #allocation2 [shape = 'f32[2,32]{1,0:T(2,128)}', space=vmem, size = 0x400, scoped, tag = 'scratch operand']
  %s0 = inlined_call_operand.vmem [shape: s32[4,2,1], index: 0, kind: input, shape index: {}]
  %s1 = inlined_call_operand.vmem [shape: f32[16,64], index: 1, kind: input, shape index: {}]
  %s2 = inlined_call_operand.hbm [shape: f32[2,128], index: 2, kind: input, shape index: {}, may-alias: {2,7}]
  %s3 = inlined_call_operand.vmem [shape: bf16[240,32], index: 3, kind: input, shape index: {}]
  %s4 = inlined_call_operand.vmem [shape: bf16[144,96], index: 4, kind: input, shape index: {}]
  %s5 = inlined_call_operand.vmem [shape: bf16[144,128], index: 5, kind: input, shape index: {}]
  %s6 = inlined_call_operand.hbm [shape: f32[4,2,128], index: 6, kind: output, shape index: {0}]
  %s7 = inlined_call_operand.hbm [shape: f32[2,128], index: 7, kind: output, shape index: {1}, may-alias: {2,7}]
  %8 = xla_tuple %s6, %s7
  %s9 = sld [smem:[#allocation0]]
  $region73: #{tpu_custom_call.1} parent=0
    _
  %s11 = ssub.s32 1, %s9
  %s12 = scalar_select 0, %s11, %s9
  $region1: #{tpu_custom_call.1} parent=0
    #allocation3 [shape = 'u8[1024]{0}', space=vmem, size = 0x400, scoped, tag = 'input window, operand 2, single buffered']
    #allocation4 [shape = 's32[2]{0}', space=sflag, size = 0x8, scoped, tag = 'scoped memory for tpu_custom_call.1']
    #allocation5 [shape = 's32[2]{0}', space=sflag, size = 0x8, scoped, tag = 'scoped memory for tpu_custom_call.1']
    #allocation6 [shape = 'u8[2048]{0}', space=vmem, size = 0x800, scoped, tag = 'output window, operand 0']
    #allocation7 [shape = 'u8[1024]{0}', space=vmem, size = 0x400, scoped, tag = 'output window, operand 1, single buffered']
    #allocation8 [shape = 's32[1]{0}', space=sflag, size = 0x4, scoped, tag = 'scoped memory for tpu_custom_call.1']
    %13 = vsyncpa [#allocation4], 0
    %14 = vsyncpa [#allocation5], 0
    %s15 = scalar_lea.sflag [#allocation5], 1
    %16 = vsyncpa %s15, 0
    %17 = vsyncpa [#allocation8], 0
    loop: start=0, step=1, limit=6
    $region2: #{tpu_custom_call.1} parent=1 // loop_pre_header
      _
    $region3: #{tpu_custom_call.1} parent=1 // loop_header
      %s19 = sphi 0, %s23
      %p20 = scmp.ge.s32.totalorder %s19, 6
      %s29 = sphi 0, %s31
      %s32 = sphi 0, %s29
      %s33 = sphi 0, %s32
      %s49 = sphi 0, %s33
      %s53 = sphi 0, %s53
      %s55 = sphi 0, %s53
      %s56 = sphi 0, %s55
      %s70 = sphi 0, %s56
      %s74 = sphi 0, %s74
      %s76 = sphi 0, %s74
      %s77 = sphi 0, %s76
      %s91 = sphi 0, %s77
      %s95 = sphi 0, %s95
      %s97 = sphi 0, %s95
      %s98 = sphi 0, %s97
      %s112 = sphi 0, %s98
      %s116 = sphi 0, %s116
      %s118 = sphi 0, %s116
      %s119 = sphi 0, %s118
      %s133 = sphi 0, %s119
      %s137 = sphi 0, %s137
      %s139 = sphi 0, %s137
      %s140 = sphi 0, %s139
      %s154 = sphi 0, %s140
      %s160 = sphi 0, %s162
      %s163 = sphi 0, %s160
      %s164 = sphi 0, %s163
      %s180 = sphi 0, %s164
      %s184 = sphi 0, %s184
      %s186 = sphi 0, %s184
      %s187 = sphi 0, %s186
      %s201 = sphi 0, %s187
    $region4: #{tpu_custom_call.1} parent=1 // loop_header_branch
      %22 = sbr.rel (%p20) target = $region8
    $region5: #{tpu_custom_call.1} parent=1 // loop_body
      %s24 = ssub.s32 %s19, 1
      %s25 = ssub.s32 %s19, 2
      %s26 = sadd.s32 %s19, 1
      %s27 = ssub.s32 %s19, %s26
      %p28 = scmp.eq.s32.totalorder %s27, 0
      %s30 = sadd.s32 %s29, 1
      %s31 = scalar_select %p28, %s29, %s30
      %p34 = pneg %p28
      %p35 = scmp.eq.s32.totalorder %s19, 3
      %p36 = por %p34, %p35
      %p37 = scmp.ne.s32.totalorder %s29, %s32
      %p38 = scmp.eq.s32.totalorder %s19, 0
      %p39 = por %p37, %p38
      %p40 = scmp.ne.s32.totalorder %s29, %s32
      %p41 = scmp.eq.s32.totalorder %s24, 3
      %p42 = por %p40, %p41
      %p43 = scmp.ne.s32.totalorder %s32, %s33
      %p44 = scmp.eq.s32.totalorder %s24, 0
      %p45 = por %p43, %p44
      %p46 = scmp.ne.s32.totalorder %s32, %s33
      %p47 = scmp.eq.s32.totalorder %s25, 3
      %p48 = por %p46, %p47
      %p50 = scmp.ne.s32.totalorder %s33, %s49
      %p51 = scmp.eq.s32.totalorder %s25, 0
      %p52 = por %p50, %p51
      %s54 = sadd.s32 %s53, 1
      %p57 = scmp.eq.s32.totalorder %s19, 3
      %p58 = scmp.ne.s32.totalorder %s53, %s55
      %p59 = scmp.eq.s32.totalorder %s19, 0
      %p60 = por %p58, %p59
      %p61 = scmp.ne.s32.totalorder %s53, %s55
      %p62 = scmp.eq.s32.totalorder %s24, 3
      %p63 = por %p61, %p62
      %p64 = scmp.ne.s32.totalorder %s55, %s56
      %p65 = scmp.eq.s32.totalorder %s24, 0
      %p66 = por %p64, %p65
      %p67 = scmp.ne.s32.totalorder %s55, %s56
      %p68 = scmp.eq.s32.totalorder %s25, 3
      %p69 = por %p67, %p68
      %p71 = scmp.ne.s32.totalorder %s56, %s70
      %p72 = scmp.eq.s32.totalorder %s25, 0
      %p73 = por %p71, %p72
      %s75 = sadd.s32 %s74, 1
      %p78 = scmp.eq.s32.totalorder %s19, 3
      %p79 = scmp.ne.s32.totalorder %s74, %s76
      %p80 = scmp.eq.s32.totalorder %s19, 0
      %p81 = por %p79, %p80
      %p82 = scmp.ne.s32.totalorder %s74, %s76
      %p83 = scmp.eq.s32.totalorder %s24, 3
      %p84 = por %p82, %p83
      %p85 = scmp.ne.s32.totalorder %s76, %s77
      %p86 = scmp.eq.s32.totalorder %s24, 0
      %p87 = por %p85, %p86
      %p88 = scmp.ne.s32.totalorder %s76, %s77
      %p89 = scmp.eq.s32.totalorder %s25, 3
      %p90 = por %p88, %p89
      %p92 = scmp.ne.s32.totalorder %s77, %s91
      %p93 = scmp.eq.s32.totalorder %s25, 0
      %p94 = por %p92, %p93
      %s96 = sadd.s32 %s95, 1
      %p99 = scmp.eq.s32.totalorder %s19, 3
      %p100 = scmp.ne.s32.totalorder %s95, %s97
      %p101 = scmp.eq.s32.totalorder %s19, 0
      %p102 = por %p100, %p101
      %p103 = scmp.ne.s32.totalorder %s95, %s97
      %p104 = scmp.eq.s32.totalorder %s24, 3
      %p105 = por %p103, %p104
      %p106 = scmp.ne.s32.totalorder %s97, %s98
      %p107 = scmp.eq.s32.totalorder %s24, 0
      %p108 = por %p106, %p107
      %p109 = scmp.ne.s32.totalorder %s97, %s98
      %p110 = scmp.eq.s32.totalorder %s25, 3
      %p111 = por %p109, %p110
      %p113 = scmp.ne.s32.totalorder %s98, %s112
      %p114 = scmp.eq.s32.totalorder %s25, 0
      %p115 = por %p113, %p114
      %s117 = sadd.s32 %s116, 1
      %p120 = scmp.eq.s32.totalorder %s19, 3
      %p121 = scmp.ne.s32.totalorder %s116, %s118
      %p122 = scmp.eq.s32.totalorder %s19, 0
      %p123 = por %p121, %p122
      %p124 = scmp.ne.s32.totalorder %s116, %s118
      %p125 = scmp.eq.s32.totalorder %s24, 3
      %p126 = por %p124, %p125
      %p127 = scmp.ne.s32.totalorder %s118, %s119
      %p128 = scmp.eq.s32.totalorder %s24, 0
      %p129 = por %p127, %p128
      %p130 = scmp.ne.s32.totalorder %s118, %s119
      %p131 = scmp.eq.s32.totalorder %s25, 3
      %p132 = por %p130, %p131
      %p134 = scmp.ne.s32.totalorder %s119, %s133
      %p135 = scmp.eq.s32.totalorder %s25, 0
      %p136 = por %p134, %p135
      %s138 = sadd.s32 %s137, 1
      %p141 = scmp.eq.s32.totalorder %s19, 3
      %p142 = scmp.ne.s32.totalorder %s137, %s139
      %p143 = scmp.eq.s32.totalorder %s19, 0
      %p144 = por %p142, %p143
      %p145 = scmp.ne.s32.totalorder %s137, %s139
      %p146 = scmp.eq.s32.totalorder %s24, 3
      %p147 = por %p145, %p146
      %p148 = scmp.ne.s32.totalorder %s139, %s140
      %p149 = scmp.eq.s32.totalorder %s24, 0
      %p150 = por %p148, %p149
      %p151 = scmp.ne.s32.totalorder %s139, %s140
      %p152 = scmp.eq.s32.totalorder %s25, 3
      %p153 = por %p151, %p152
      %p155 = scmp.ne.s32.totalorder %s140, %s154
      %p156 = scmp.eq.s32.totalorder %s25, 0
      %p157 = por %p155, %p156
      %s158 = ssub.s32 %s19, %s26
      %p159 = scmp.eq.s32.totalorder %s158, 0
      %s161 = sadd.s32 %s160, 1
      %s162 = scalar_select %p159, %s160, %s161
      %p165 = pneg %p159
      %p166 = scmp.eq.s32.totalorder %s19, 3
      %p167 = por %p165, %p166
      %p168 = scmp.ne.s32.totalorder %s160, %s163
      %p169 = scmp.eq.s32.totalorder %s19, 0
      %p170 = por %p168, %p169
      %p171 = scmp.ne.s32.totalorder %s160, %s163
      %p172 = scmp.eq.s32.totalorder %s24, 3
      %p173 = por %p171, %p172
      %p174 = scmp.ne.s32.totalorder %s163, %s164
      %p175 = scmp.eq.s32.totalorder %s24, 0
      %p176 = por %p174, %p175
      %p177 = scmp.ne.s32.totalorder %s163, %s164
      %p178 = scmp.eq.s32.totalorder %s25, 3
      %p179 = por %p177, %p178
      %p181 = scmp.ne.s32.totalorder %s164, %s180
      %p182 = scmp.eq.s32.totalorder %s25, 0
      %p183 = por %p181, %p182
      %s185 = sadd.s32 %s184, 1
      %p188 = scmp.eq.s32.totalorder %s19, 3
      %p189 = scmp.ne.s32.totalorder %s184, %s186
      %p190 = scmp.eq.s32.totalorder %s19, 0
      %p191 = por %p189, %p190
      %p192 = scmp.ne.s32.totalorder %s184, %s186
      %p193 = scmp.eq.s32.totalorder %s24, 3
      %p194 = por %p192, %p193
      %p195 = scmp.ne.s32.totalorder %s186, %s187
      %p196 = scmp.eq.s32.totalorder %s24, 0
      %p197 = por %p195, %p196
      %p198 = scmp.ne.s32.totalorder %s186, %s187
      %p199 = scmp.eq.s32.totalorder %s25, 3
      %p200 = por %p198, %p199
      %p202 = scmp.ne.s32.totalorder %s187, %s201
      %p203 = scmp.eq.s32.totalorder %s25, 0
      %p204 = por %p202, %p203
      %p205 = scmp.le.s32.totalorder 1, %s19
      %p206 = scmp.lt.s32.totalorder %s19, 5
      %p207 = pnand %p205, %p206
      %p208 = pneg %p207
      // Predicated region
      $region9: #{tpu_custom_call.1} parent=5 // pred_check
        _
      $region10: #{tpu_custom_call.1} parent=5 // pred_check_branch
        %210 = sbr.rel (%p207) target = $region12
      $region11: #{tpu_custom_call.1} parent=5 // pred_region
        %s211 = ssub.s32 %s19, 1
        // Predicated region
        $region13: #{tpu_custom_call.1} parent=11 // pred_check
          %p212 = pneg %p66
        $region14: #{tpu_custom_call.1} parent=11 // pred_check_branch
          %214 = sbr.rel (%p212) target = $region16
        $region15: #{tpu_custom_call.1} parent=11 // pred_region
          _
        $region16: #{tpu_custom_call.1} parent=11 // pred_fallthru
          _
        // Predicated region
        $region17: #{tpu_custom_call.1} parent=11 // pred_check
          %p215 = pneg %p87
        $region18: #{tpu_custom_call.1} parent=11 // pred_check_branch
          %217 = sbr.rel (%p215) target = $region20
        $region19: #{tpu_custom_call.1} parent=11 // pred_region
          %s219 = ssub.s32 32, 32
          %220 = vsyncadd [#allocation4], %s219
          %s222 = sshll.u32 [#allocation3], 4
          %s223 = int_to_ptr.vmem [resolvable:$true] %s222
          %225 = dma.hbm_to_vmem [thread:$0]  %s2, 32, %s223, [#allocation4]
        $region20: #{tpu_custom_call.1} parent=11 // pred_fallthru
          _
        // Predicated region
        $region21: #{tpu_custom_call.1} parent=11 // pred_check
          %p226 = pneg %p108
        $region22: #{tpu_custom_call.1} parent=11 // pred_check_branch
          %228 = sbr.rel (%p226) target = $region24
        $region23: #{tpu_custom_call.1} parent=11 // pred_region
          _
        $region24: #{tpu_custom_call.1} parent=11 // pred_fallthru
          _
        // Predicated region
        $region25: #{tpu_custom_call.1} parent=11 // pred_check
          %p229 = pneg %p129
        $region26: #{tpu_custom_call.1} parent=11 // pred_check_branch
          %231 = sbr.rel (%p229) target = $region28
        $region27: #{tpu_custom_call.1} parent=11 // pred_region
          _
        $region28: #{tpu_custom_call.1} parent=11 // pred_fallthru
          _
        // Predicated region
        $region29: #{tpu_custom_call.1} parent=11 // pred_check
          %p232 = pneg %p150
        $region30: #{tpu_custom_call.1} parent=11 // pred_check_branch
          %234 = sbr.rel (%p232) target = $region32
        $region31: #{tpu_custom_call.1} parent=11 // pred_region
          _
        $region32: #{tpu_custom_call.1} parent=11 // pred_fallthru
          _
      $region12: #{tpu_custom_call.1} parent=5 // pred_fallthru
        _
      %p235 = scmp.lt.s32.totalorder %s19, 4
      // Predicated region
      $region33: #{tpu_custom_call.1} parent=5 // pred_check
        %p236 = pneg %p235
      $region34: #{tpu_custom_call.1} parent=5 // pred_check_branch
        %238 = sbr.rel (%p236) target = $region36
      $region35: #{tpu_custom_call.1} parent=5 // pred_region
        // Predicated region
        $region37: #{tpu_custom_call.1} parent=35 // pred_check
          %p239 = pneg %p39
        $region38: #{tpu_custom_call.1} parent=35 // pred_check_branch
          %241 = sbr.rel (%p239) target = $region40
        $region39: #{tpu_custom_call.1} parent=35 // pred_region
          %p242 = scmp.lt.s32.totalorder %s19, 3
          %s243 = scalar_select %p242, %s19, 3
          %s244 = smul.addr %s243, 2
          %s245 = scalar_lea.vmem %s0, %s244
        $region40: #{tpu_custom_call.1} parent=35 // pred_fallthru
          _
      $region36: #{tpu_custom_call.1} parent=5 // pred_fallthru
        _
      %p246 = scmp.le.s32.totalorder 1, %s19
      %p247 = scmp.lt.s32.totalorder %s19, 5
      %p248 = pnand %p246, %p247
      %p249 = pneg %p248
      // Predicated region
      $region41: #{tpu_custom_call.1} parent=5 // pred_check
        _
      $region42: #{tpu_custom_call.1} parent=5 // pred_check_branch
        %251 = sbr.rel (%p248) target = $region44
      $region43: #{tpu_custom_call.1} parent=5 // pred_region
        %s252 = ssub.s32 %s19, 1
        // Predicated region
        $region45: #{tpu_custom_call.1} parent=43 // pred_check
          %p253 = pneg %p87
        $region46: #{tpu_custom_call.1} parent=43 // pred_check_branch
          %255 = sbr.rel (%p253) target = $region48
        $region47: #{tpu_custom_call.1} parent=43 // pred_region
          %256 = dma.done [#allocation4], 32
        $region48: #{tpu_custom_call.1} parent=43 // pred_fallthru
          _
        %p257 = scmp.lt.s32.totalorder %s24, 3
        %s258 = scalar_select %p257, %s24, 3
        %s259 = smul.addr %s258, 2
        %s260 = scalar_lea.vmem %s0, %s259
        %p261 = pneg %p45
        %p262 = pneg %p42
        %p263 = pneg %p66
        %p264 = pneg %p63
        %p265 = pneg %p87
        %p266 = pneg %p84
        %p267 = pneg %p108
        %p268 = pneg %p105
        %p269 = pneg %p129
        %p270 = pneg %p126
        %p271 = pneg %p150
        %p272 = pneg %p147
        %p273 = pneg %p176
        %p274 = pneg %p173
        %s275 = sand.u32 %s163, 1
        %s276 = scalar_lea.sflag [#allocation5], %s275
        %s277 = sand.u32 %s163, 1
        %s278 = smul.addr %s277, 2
        %s279 = scalar_lea.vmem [#allocation6], %s278
        %p280 = pneg %p197
        %p281 = pneg %p194
        %p282 = scmp.lt.s32.totalorder %s24, 3
        %s283 = scalar_select %p282, %s24, 3
        %s284 = smul.addr %s283, 2
        %s285 = scalar_lea.vmem %s0, %s284
        %p287 = scmp.eq.s32.totalorder %s24, 0
        // Predicated region
        $region49: #{tpu_custom_call.1} parent=43 // pred_check
          %p288 = pneg %p287
        $region50: #{tpu_custom_call.1} parent=43 // pred_check_branch
          %290 = sbr.rel (%p288) target = $region52
        $region51: #{tpu_custom_call.1} parent=43 // pred_region
          %v291 = vld [vmem:[#allocation3] sm:$0x3]
          %vm292 = vcmask 254976
          %293 = vst.msk [vmem:[#allocation2] sm:$0x3] %vm292, %v291
        $region52: #{tpu_custom_call.1} parent=43 // pred_fallthru
          _
        %v294 = vld [vmem:[#allocation2] sm:$0x3]
        %v295 = vpack.c.bf16 %v294, %v294
        %v296 = vld [vmem:[%s1] sm:$0xff]
        %v297 = vld [vmem:[%s1 + $0x8] sm:$0xff]
        %v298 = vpack.c.bf16 %v297, %v296
        %v299 = vld [vmem:[%s285] sm:$0x3]
        %v300 = vlaneseq
        %v301 = vand.u32 %v300, 127
        %302 = vset.pattern.permute.xlu0 0
        %303 = vperm.xlu0 %302, %v299
        %v304 = vpop.permute.xlu0 %303
        %vm305 = vcmp.eq.s32.totalorder %v301, %v304
        %v306 = vsel %vm305, 1.0, 0.0
        %v307 = vpack.c.bf16 %v306, %v306
        %v308 = vld [vmem:[%s3 + $0x38] sm:$0xf]
        %v309 = vld [vmem:[%s3 + $0x3c] sm:$0xf]
        %v310 = vld [vmem:[%s3 + $0x40] sm:$0xf]
        %v311 = vld [vmem:[%s3 + $0x44] sm:$0xf]
        %v312 = vld [vmem:[%s3 + $0x48] sm:$0xf]
        %v313 = vld [vmem:[%s3 + $0x4c] sm:$0xf]
        %v314 = vld [vmem:[%s3 + $0x50] sm:$0xf]
        %v315 = vld [vmem:[%s3 + $0x54] sm:$0xf]
        %v316 = vld [vmem:[%s3 + $0x58] sm:$0xf]
        %v317 = vld [vmem:[%s3 + $0x5c] sm:$0xf]
        %v318 = vld [vmem:[%s3 + $0x60] sm:$0xf]
        %v319 = vld [vmem:[%s3 + $0x64] sm:$0xf]
        %v320 = vld [vmem:[%s3 + $0x68] sm:$0xf]
        %v321 = vld [vmem:[%s3 + $0x6c] sm:$0xf]
        %v322 = vld [vmem:[%s3 + $0x70] sm:$0xf]
        %v323 = vld [vmem:[%s3 + $0x74] sm:$0xf]
        %v340 = vunpack.c.l.b16 %v308
        %v341 = vunpack.c.l.b16 %v309
        %v342 = vunpack.c.l.b16 %v310
        %v343 = vunpack.c.l.b16 %v311
        %v344 = vunpack.c.l.b16 %v312
        %v345 = vunpack.c.l.b16 %v313
        %v346 = vunpack.c.l.b16 %v314
        %v347 = vunpack.c.l.b16 %v315
        %v348 = vunpack.c.l.b16 %v316
        %v349 = vunpack.c.l.b16 %v317
        %v350 = vunpack.c.l.b16 %v318
        %v351 = vunpack.c.l.b16 %v319
        %v352 = vunpack.c.l.b16 %v320
        %v353 = vunpack.c.l.b16 %v321
        %v354 = vunpack.c.l.b16 %v322
        %v355 = vunpack.c.l.b16 %v323
        %v356 = vpack.c.b16 %v341, %v340
        %v357 = vpack.c.b16 %v343, %v342
        %v358 = vpack.c.b16 %v345, %v344
        %v359 = vpack.c.b16 %v347, %v346
        %v360 = vpack.c.b16 %v349, %v348
        %v361 = vpack.c.b16 %v351, %v350
        %v362 = vpack.c.b16 %v353, %v352
        %v363 = vpack.c.b16 %v355, %v354
        %372 = vmatprep.subr.bf16.mxu0 0
        %373 = vmatpush1.bf16.msra.mxu0 %v356
        %374 = vmatprep.subr.bf16.mxu0 0
        %375 = vmatpush1.bf16.msra.mxu0 %v357
        %376 = vmatprep.subr.bf16.mxu0 0
        %377 = vmatpush1.bf16.msra.mxu0 %v358
        %378 = vmatprep.subr.bf16.mxu0 0
        %379 = vmatpush1.bf16.msra.mxu0 %v359
        %380 = vmatprep.subr.bf16.mxu0 0
        %381 = vmatpush1.bf16.msra.mxu0 %v360
        %382 = vmatprep.subr.bf16.mxu0 0
        %383 = vmatpush1.bf16.msra.mxu0 %v361
        %384 = vmatprep.subr.bf16.mxu0 0
        %385 = vmatpush1.bf16.msra.mxu0 %v362
        %386 = vmatprep.subr.bf16.mxu0 0
        %387 = vmatpush1.bf16.msra.mxu0 %v363
        %388 = vmatprep.subr.bf16.mxu0 0
        %389 = vmatpush1.bf16.msra.mxu0 0
        %390 = vmatprep.subr.bf16.mxu0 0
        %391 = vmatpush1.bf16.msra.mxu0 0
        %392 = vmatprep.subr.bf16.mxu0 0
        %393 = vmatpush1.bf16.msra.mxu0 0
        %394 = vmatprep.subr.bf16.mxu0 0
        %395 = vmatpush1.bf16.msra.mxu0 0
        %396 = vmatprep.subr.bf16.mxu0 0
        %397 = vmatpush1.bf16.msra.mxu0 0
        %398 = vmatprep.subr.bf16.mxu0 0
        %399 = vmatpush1.bf16.msra.mxu0 0
        %400 = vmatprep.subr.bf16.mxu0 0
        %401 = vmatpush1.bf16.msra.mxu0 0
        %402 = vmatprep.subr.bf16.mxu0 0
        %403 = vmatpush1.bf16.msra.mxu0 0
        %404 = vmatprep.mubr.bf16.mxu0 0
        %405 = vmatmul.mubr.bf16.gmra.mrb[0].mxu0 %v307
        %v406 = vpop.f32.mrb[0].mxu0
        %v407 = vadd.f32 0.0, %v406
        %v408 = vpop.f32.mrb[0].mxu0
        %v409 = vpop.f32.mrb[0].mxu0
        %v410 = vpop.f32.mrb[0].mxu0
        %411 = vdwg.mxu0
        %v412 = vld [vmem:[%s3] sm:$0xf]
        %v413 = vld [vmem:[%s3 + $0x4] sm:$0xf]
        %v414 = vld [vmem:[%s3 + $0x8] sm:$0xf]
        %v415 = vld [vmem:[%s3 + $0xc] sm:$0xf]
        %v416 = vld [vmem:[%s3 + $0x10] sm:$0xf]
        %v417 = vld [vmem:[%s3 + $0x14] sm:$0xf]
        %v418 = vld [vmem:[%s3 + $0x18] sm:$0xf]
        %v419 = vld [vmem:[%s3 + $0x1c] sm:$0xf]
        %v420 = vld [vmem:[%s3 + $0x20] sm:$0xf]
        %v421 = vld [vmem:[%s3 + $0x24] sm:$0xf]
        %v422 = vld [vmem:[%s3 + $0x28] sm:$0xf]
        %v423 = vld [vmem:[%s3 + $0x2c] sm:$0xf]
        %v424 = vld [vmem:[%s3 + $0x30] sm:$0x1]
        %v425 = vunpack.c.l.bf16 %v424
        %v430 = vunpack.c.l.b16 %v412
        %v431 = vunpack.c.l.b16 %v413
        %v432 = vunpack.c.l.b16 %v414
        %v433 = vunpack.c.l.b16 %v415
        %v434 = vpack.c.b16 %v431, %v430
        %v435 = vpack.c.b16 %v433, %v432
        %vm438 = vcmask 261120
        %v440 = vsel %vm438, %v295, 0
        %442 = vmatprep.subr.bf16.mxu0 0
        %443 = vmatpush1.bf16.msra.mxu0 %v434
        %444 = vmatprep.subr.bf16.mxu0 0
        %445 = vmatpush1.bf16.msra.mxu0 %v435
        %446 = vmatprep.subr.bf16.mxu0 0
        %447 = vmatpush1.bf16.msra.mxu0 0
        %448 = vmatprep.subr.bf16.mxu0 0
        %449 = vmatpush1.bf16.msra.mxu0 0
        %450 = vmatprep.subr.bf16.mxu0 0
        %451 = vmatpush1.bf16.msra.mxu0 0
        %452 = vmatprep.subr.bf16.mxu0 0
        %453 = vmatpush1.bf16.msra.mxu0 0
        %454 = vmatprep.subr.bf16.mxu0 0
        %455 = vmatpush1.bf16.msra.mxu0 0
        %456 = vmatprep.subr.bf16.mxu0 0
        %457 = vmatpush1.bf16.msra.mxu0 0
        %458 = vmatprep.subr.bf16.mxu0 0
        %459 = vmatpush1.bf16.msra.mxu0 0
        %460 = vmatprep.subr.bf16.mxu0 0
        %461 = vmatpush1.bf16.msra.mxu0 0
        %462 = vmatprep.subr.bf16.mxu0 0
        %463 = vmatpush1.bf16.msra.mxu0 0
        %464 = vmatprep.subr.bf16.mxu0 0
        %465 = vmatpush1.bf16.msra.mxu0 0
        %466 = vmatprep.subr.bf16.mxu0 0
        %467 = vmatpush1.bf16.msra.mxu0 0
        %468 = vmatprep.subr.bf16.mxu0 0
        %469 = vmatpush1.bf16.msra.mxu0 0
        %470 = vmatprep.subr.bf16.mxu0 0
        %471 = vmatpush1.bf16.msra.mxu0 0
        %472 = vmatprep.subr.bf16.mxu0 0
        %473 = vmatpush1.bf16.msra.mxu0 0
        %474 = vmatprep.mubr.bf16.mxu0 0
        %475 = vmatmul.mubr.bf16.gmra.mrb[0].mxu0 %v440
        %v476 = vpop.f32.mrb[0].mxu0
        %v477 = vadd.f32 0.0, %v476
        %v478 = vpop.f32.mrb[0].mxu0
        %v479 = vpop.f32.mrb[0].mxu0
        %v480 = vpop.f32.mrb[0].mxu0
        %481 = vdwg.mxu0
        %v490 = vunpack.c.l.b16 %v416
        %v491 = vunpack.c.l.b16 %v417
        %v492 = vunpack.c.l.b16 %v418
        %v493 = vunpack.c.l.b16 %v419
        %v494 = vunpack.c.l.b16 %v420
        %v495 = vunpack.c.l.b16 %v421
        %v496 = vunpack.c.l.b16 %v422
        %v497 = vunpack.c.l.b16 %v423
        %v498 = vpack.c.b16 %v491, %v490
        %v499 = vpack.c.b16 %v493, %v492
        %v500 = vpack.c.b16 %v495, %v494
        %v501 = vpack.c.b16 %v497, %v496
        %vm506 = vcmask 523264
        %v508 = vsel %vm506, %v298, 0
        %510 = vmatprep.subr.bf16.mxu0 0
        %511 = vmatpush1.bf16.msra.mxu0 %v498
        %512 = vmatprep.subr.bf16.mxu0 0
        %513 = vmatpush1.bf16.msra.mxu0 %v499
        %514 = vmatprep.subr.bf16.mxu0 0
        %515 = vmatpush1.bf16.msra.mxu0 %v500
        %516 = vmatprep.subr.bf16.mxu0 0
        %517 = vmatpush1.bf16.msra.mxu0 %v501
        %518 = vmatprep.subr.bf16.mxu0 0
        %519 = vmatpush1.bf16.msra.mxu0 0
        %520 = vmatprep.subr.bf16.mxu0 0
        %521 = vmatpush1.bf16.msra.mxu0 0
        %522 = vmatprep.subr.bf16.mxu0 0
        %523 = vmatpush1.bf16.msra.mxu0 0
        %524 = vmatprep.subr.bf16.mxu0 0
        %525 = vmatpush1.bf16.msra.mxu0 0
        %526 = vmatprep.subr.bf16.mxu0 0
        %527 = vmatpush1.bf16.msra.mxu0 0
        %528 = vmatprep.subr.bf16.mxu0 0
        %529 = vmatpush1.bf16.msra.mxu0 0
        %530 = vmatprep.subr.bf16.mxu0 0
        %531 = vmatpush1.bf16.msra.mxu0 0
        %532 = vmatprep.subr.bf16.mxu0 0
        %533 = vmatpush1.bf16.msra.mxu0 0
        %534 = vmatprep.subr.bf16.mxu0 0
        %535 = vmatpush1.bf16.msra.mxu0 0
        %536 = vmatprep.subr.bf16.mxu0 0
        %537 = vmatpush1.bf16.msra.mxu0 0
        %538 = vmatprep.subr.bf16.mxu0 0
        %539 = vmatpush1.bf16.msra.mxu0 0
        %540 = vmatprep.subr.bf16.mxu0 0
        %541 = vmatpush1.bf16.msra.mxu0 0
        %542 = vmatprep.mubr.bf16.mxu0 0
        %543 = vmatmul.mubr.bf16.gmra.mrb[0].mxu0 %v508
        %v544 = vpop.f32.mrb[0].mxu0
        %v545 = vadd.f32 0.0, %v544
        %v546 = vpop.f32.mrb[0].mxu0
        %v547 = vpop.f32.mrb[0].mxu0
        %v548 = vadd.f32 0.0, %v547
        %v549 = vpop.f32.mrb[0].mxu0
        %550 = vdwg.mxu0
        %v553 = vunpack.c.l.s4 1966171168
        %v554 = vunpack.c.0.s8 %v553
        %v555 = vlaneseq
        %v556 = vshrl.u32 %v555, 7
        %v557 = vsub.s32 %v554, %v556
        %v558 = vrot.slane %v477, %v557
        %v559 = vcombine.high %v558, %v558
        %v561 = vunpack.c.l.s4 1966171168
        %v562 = vunpack.c.0.s8 %v561
        %v563 = vlaneseq
        %v564 = vshrl.u32 %v563, 7
        %v565 = vsub.s32 %v562, %v564
        %v566 = vrot.slane %v558, %v565
        %v568 = vunpack.c.l.s4 1966171168
        %v569 = vunpack.c.0.s8 %v568
        %v570 = vlaneseq
        %v571 = vshrl.u32 %v570, 7
        %v572 = vsub.s32 %v569, %v571
        %v573 = vrot.slane %v559, %v572
        %v574 = vlaneseq
        %v575 = vshrl.u32 %v574, 7
        %v576 = vsub.s32 0, %v575
        %v577 = vrot.slane %v566, %v576
        %v578 = vlaneseq
        %v579 = vshrl.u32 %v578, 7
        %v580 = vsub.s32 0, %v579
        %v581 = vrot.slane %v573, %v580
        %v584 = vadd.f32 %v545, %v577
        %v585 = vadd.f32 %v548, %v581
        %v586 = vlaneseq
        %v587 = vshrl.u32 %v586, 7
        %v588 = vsub.s32 0, %v587
        %v589 = vrot.slane %v425, %v588
        %v590 = vadd.f32 %v584, %v589
        %v591 = vadd.f32 %v585, %v589
        %v592 = vtanh.pop %v590
        %v593 = vtanh.pop %v591
        %v594 = vlaneseq
        %v595 = vshrl.u32 %v594, 7
        %v596 = vsub.s32 1, %v595
        %v597 = vrot.slane %v425, %v596
        %v598 = vmul.f32 %v592, %v597
        %v599 = vmul.f32 %v593, %v597
        %v600 = vsel %vm438, %v598, 0.0
        %601 = vadd.xlane.f32.xlu0 %v600
        %v602 = vpop.xlane.xlu0 %601
        %v603 = vsel %vm438, %v599, 0.0
        %604 = vadd.xlane.f32.xlu0 %v603
        %v605 = vpop.xlane.xlu0 %604
        %v608 = vlaneseq
        %v609 = vshrl.u32 %v608, 7
        %v610 = vsub.s32 %v301, %v609
        %v611 = vrot.slane %v602, %v610
        %v612 = vlaneseq
        %v613 = vshrl.u32 %v612, 7
        %v614 = vsub.s32 %v301, %v613
        %v615 = vrot.slane %v605, %v614
        %vm616 = vcmask 1041409
        %v617 = vsel %vm616, %v615, %v611
        %vm619 = vcmask 58368
        %v620 = vsel %vm619, %v617, -inf
        %621 = vmax.xlane.f32.xlu0 %v620
        %v622 = vpop.xlane.xlu0 %621
        %v624 = vlaneseq
        %v625 = vshrl.u32 %v624, 7
        %v626 = vsub.s32 0, %v625
        %v627 = vrot.slane %v622, %v626
        %v628 = vlaneseq
        %v629 = vshrl.u32 %v628, 7
        %v630 = vsub.s32 1, %v629
        %v631 = vrot.slane %v622, %v630
        %v634 = vsub.f32 %v602, %v627
        %v635 = vsub.f32 %v605, %v631
        %v636 = vmul.f32 %v634, 1.442695
        %v637 = vpow.pop %v636
        %v638 = vmul.f32 %v635, 1.442695
        %v639 = vpow.pop %v638
        %642 = vset.pattern.permute.xlu0 0
        %643 = vperm.xlu0 %642, %v637
        %v644 = vpop.permute.xlu0 %643
        %645 = vset.pattern.permute.xlu0 0
        %646 = vperm.xlu0 %645, %v639
        %v647 = vpop.permute.xlu0 %646
        %v648 = vlaneseq
        %v649 = vshrl.u32 %v648, 7
        %v650 = vsub.s32 %v301, %v649
        %v651 = vrot.slane %v644, %v650
        %v652 = vlaneseq
        %v653 = vshrl.u32 %v652, 7
        %v654 = vsub.s32 %v301, %v653
        %v655 = vrot.slane %v647, %v654
        %v656 = vsel %vm616, %v655, %v651
        %v658 = vsel %vm619, %v656, 0.0
        %659 = vadd.xlane.f32.xlu0 %v658
        %v660 = vpop.xlane.xlu0 %659
        %v661 = vrcp.pop %v660
        %v663 = vlaneseq
        %v664 = vshrl.u32 %v663, 7
        %v665 = vsub.s32 0, %v664
        %v666 = vrot.slane %v661, %v665
        %v667 = vlaneseq
        %v668 = vshrl.u32 %v667, 7
        %v669 = vsub.s32 1, %v668
        %v670 = vrot.slane %v661, %v669
        %v673 = vmul.f32 %v637, %v666
        %v674 = vmul.f32 %v639, %v670
        %676 = vset.pattern.permute.xlu0 0
        %677 = vperm.xlu0 %676, %v673
        %v678 = vpop.permute.xlu0 %677
        %681 = vset.pattern.permute.xlu0 0
        %682 = vperm.xlu0 %681, %v674
        %v683 = vpop.permute.xlu0 %682
        %v685 = vmul.f32 %v678, %v296
        %v686 = vmul.f32 %v683, %v297
        %v687 = vsel %vm506, %v685, 0.0
        %v688 = vrot.slane %v687, 4
        %v689 = vadd.f32 %v687, %v688
        %v690 = vrot.slane %v689, 2
        %v691 = vadd.f32 %v689, %v690
        %v692 = vrot.slane %v691, 1
        %v693 = vadd.f32 %v691, %v692
        %v694 = vsel %vm506, %v686, 0.0
        %v695 = vrot.slane %v694, 4
        %v696 = vadd.f32 %v694, %v695
        %v697 = vrot.slane %v696, 2
        %v698 = vadd.f32 %v696, %v697
        %v699 = vrot.slane %v698, 1
        %v700 = vadd.f32 %v698, %v699
        %v701 = vld [vmem:[%s4] sm:$0xf]
        %v702 = vld [vmem:[%s4 + $0x4] sm:$0xf]
        %v703 = vld [vmem:[%s4 + $0x8] sm:$0xf]
        %v704 = vld [vmem:[%s4 + $0xc] sm:$0xf]
        %v705 = vld [vmem:[%s4 + $0x10] sm:$0xf]
        %v706 = vld [vmem:[%s4 + $0x14] sm:$0xf]
        %v707 = vld [vmem:[%s4 + $0x18] sm:$0xf]
        %v708 = vld [vmem:[%s4 + $0x1c] sm:$0xf]
        %v709 = vld [vmem:[%s4 + $0x20] sm:$0xf]
        %v710 = vld [vmem:[%s4 + $0x24] sm:$0xf]
        %v711 = vld [vmem:[%s4 + $0x28] sm:$0xf]
        %v712 = vld [vmem:[%s4 + $0x2c] sm:$0xf]
        %v713 = vld [vmem:[%s4 + $0x30] sm:$0xf]
        %v714 = vld [vmem:[%s4 + $0x34] sm:$0xf]
        %v715 = vld [vmem:[%s4 + $0x38] sm:$0xf]
        %v716 = vld [vmem:[%s4 + $0x3c] sm:$0xf]
        %v717 = vld [vmem:[%s4 + $0x40] sm:$0x1]
        %v718 = vunpack.c.l.bf16 %v717
        %v721 = vsel %vm616, %v700, %v693
        %722 = vrot.lane.b32.xlu0 %v721, 32
        %v723 = vpop.permute.xlu0 %722
        %v725 = vsel %vm438, %v407, %v723
        %v726 = vpack.c.bf16 %v725, %v725
        %v727 = vlaneseq
        %v728 = vshrl.u32 %v727, 7
        %v729 = vsub.s32 0, %v728
        %v730 = vrot.slane %v718, %v729
        %v743 = vunpack.c.l.b16 %v701
        %v744 = vunpack.c.l.b16 %v702
        %v745 = vunpack.c.l.b16 %v703
        %v746 = vunpack.c.l.b16 %v704
        %v747 = vunpack.c.l.b16 %v705
        %v748 = vunpack.c.l.b16 %v706
        %v749 = vunpack.c.l.b16 %v707
        %v750 = vunpack.c.l.b16 %v708
        %v751 = vunpack.c.l.b16 %v709
        %v752 = vunpack.c.l.b16 %v710
        %v753 = vunpack.c.l.b16 %v711
        %v754 = vunpack.c.l.b16 %v712
        %v755 = vpack.c.b16 %v744, %v743
        %v756 = vpack.c.b16 %v746, %v745
        %v757 = vpack.c.b16 %v748, %v747
        %v758 = vpack.c.b16 %v750, %v749
        %v759 = vpack.c.b16 %v752, %v751
        %v760 = vpack.c.b16 %v754, %v753
        %vm767 = vcmask 785408
        %v769 = vsel %vm767, %v726, 0
        %771 = vmatprep.subr.bf16.mxu0 0
        %772 = vmatpush1.bf16.msra.mxu0 %v755
        %773 = vmatprep.subr.bf16.mxu0 0
        %774 = vmatpush1.bf16.msra.mxu0 %v756
        %775 = vmatprep.subr.bf16.mxu0 0
        %776 = vmatpush1.bf16.msra.mxu0 %v757
        %777 = vmatprep.subr.bf16.mxu0 0
        %778 = vmatpush1.bf16.msra.mxu0 %v758
        %779 = vmatprep.subr.bf16.mxu0 0
        %780 = vmatpush1.bf16.msra.mxu0 %v759
        %781 = vmatprep.subr.bf16.mxu0 0
        %782 = vmatpush1.bf16.msra.mxu0 %v760
        %783 = vmatprep.subr.bf16.mxu0 0
        %784 = vmatpush1.bf16.msra.mxu0 0
        %785 = vmatprep.subr.bf16.mxu0 0
        %786 = vmatpush1.bf16.msra.mxu0 0
        %787 = vmatprep.subr.bf16.mxu0 0
        %788 = vmatpush1.bf16.msra.mxu0 0
        %789 = vmatprep.subr.bf16.mxu0 0
        %790 = vmatpush1.bf16.msra.mxu0 0
        %791 = vmatprep.subr.bf16.mxu0 0
        %792 = vmatpush1.bf16.msra.mxu0 0
        %793 = vmatprep.subr.bf16.mxu0 0
        %794 = vmatpush1.bf16.msra.mxu0 0
        %795 = vmatprep.subr.bf16.mxu0 0
        %796 = vmatpush1.bf16.msra.mxu0 0
        %797 = vmatprep.subr.bf16.mxu0 0
        %798 = vmatpush1.bf16.msra.mxu0 0
        %799 = vmatprep.subr.bf16.mxu0 0
        %800 = vmatpush1.bf16.msra.mxu0 0
        %801 = vmatprep.subr.bf16.mxu0 0
        %802 = vmatpush1.bf16.msra.mxu0 0
        %803 = vmatprep.mubr.bf16.mxu0 0
        %804 = vmatmul.mubr.bf16.gmra.mrb[0].mxu0 %v769
        %v805 = vpop.f32.mrb[0].mxu0
        %v806 = vadd.f32 %v730, %v805
        %v807 = vpop.f32.mrb[0].mxu0
        %v808 = vpop.f32.mrb[0].mxu0
        %v809 = vpop.f32.mrb[0].mxu0
        %810 = vdwg.mxu0
        %v811 = vlaneseq
        %v812 = vshrl.u32 %v811, 7
        %v813 = vsub.s32 1, %v812
        %v814 = vrot.slane %v718, %v813
        %v819 = vunpack.c.l.b16 %v713
        %v820 = vunpack.c.l.b16 %v714
        %v821 = vunpack.c.l.b16 %v715
        %v822 = vunpack.c.l.b16 %v716
        %v823 = vpack.c.b16 %v820, %v819
        %v824 = vpack.c.b16 %v822, %v821
        %827 = vmatprep.subr.bf16.mxu0 0
        %828 = vmatpush1.bf16.msra.mxu0 %v823
        %829 = vmatprep.subr.bf16.mxu0 0
        %830 = vmatpush1.bf16.msra.mxu0 %v824
        %831 = vmatprep.subr.bf16.mxu0 0
        %832 = vmatpush1.bf16.msra.mxu0 0
        %833 = vmatprep.subr.bf16.mxu0 0
        %834 = vmatpush1.bf16.msra.mxu0 0
        %835 = vmatprep.subr.bf16.mxu0 0
        %836 = vmatpush1.bf16.msra.mxu0 0
        %837 = vmatprep.subr.bf16.mxu0 0
        %838 = vmatpush1.bf16.msra.mxu0 0
        %839 = vmatprep.subr.bf16.mxu0 0
        %840 = vmatpush1.bf16.msra.mxu0 0
        %841 = vmatprep.subr.bf16.mxu0 0
        %842 = vmatpush1.bf16.msra.mxu0 0
        %843 = vmatprep.subr.bf16.mxu0 0
        %844 = vmatpush1.bf16.msra.mxu0 0
        %845 = vmatprep.subr.bf16.mxu0 0
        %846 = vmatpush1.bf16.msra.mxu0 0
        %847 = vmatprep.subr.bf16.mxu0 0
        %848 = vmatpush1.bf16.msra.mxu0 0
        %849 = vmatprep.subr.bf16.mxu0 0
        %850 = vmatpush1.bf16.msra.mxu0 0
        %851 = vmatprep.subr.bf16.mxu0 0
        %852 = vmatpush1.bf16.msra.mxu0 0
        %853 = vmatprep.subr.bf16.mxu0 0
        %854 = vmatpush1.bf16.msra.mxu0 0
        %855 = vmatprep.subr.bf16.mxu0 0
        %856 = vmatpush1.bf16.msra.mxu0 0
        %857 = vmatprep.subr.bf16.mxu0 0
        %858 = vmatpush1.bf16.msra.mxu0 0
        %859 = vmatprep.mubr.bf16.mxu0 0
        %860 = vmatmul.mubr.bf16.gmra.mrb[0].mxu0 %v440
        %v861 = vpop.f32.mrb[0].mxu0
        %v862 = vadd.f32 %v814, %v861
        %v863 = vpop.f32.mrb[0].mxu0
        %v864 = vpop.f32.mrb[0].mxu0
        %v865 = vpop.f32.mrb[0].mxu0
        %866 = vdwg.mxu0
        %v867 = vadd.f32 %v806, %v862
        %v868 = vxor.u32 %v867, 2147483648
        %v869 = vmul.f32 %v868, 1.442695
        %v870 = vpow.pop %v869
        %v871 = vadd.f32 %v870, 1.0
        %v872 = vrcp.pop %v871
        %v873 = vmul.f32 1.0, %v872
        %875 = vrot.lane.b32.xlu0 %v862, 64
        %v876 = vpop.permute.xlu0 %875
        %v878 = vmul.f32 %v873, %v876
        %880 = vrot.lane.b32.xlu0 %v878, 64
        %v881 = vpop.permute.xlu0 %880
        %v883 = vadd.f32 %v806, %v881
        %v884 = vtanh.pop %v883
        %v885 = vsub.f32 1.0, %v873
        %887 = vrot.lane.b32.xlu0 %v884, 96
        %v888 = vpop.permute.xlu0 %887
        %v890 = vmul.f32 %v885, %v888
        %892 = vrot.lane.b32.xlu0 %v294, 32
        %v893 = vpop.permute.xlu0 %892
        %v895 = vmul.f32 %v873, %v893
        %v896 = vadd.f32 %v890, %v895
        %v897 = vld [vmem:[%s5] sm:$0xf]
        %v898 = vld [vmem:[%s5 + $0x4] sm:$0xf]
        %v899 = vld [vmem:[%s5 + $0x8] sm:$0xf]
        %v900 = vld [vmem:[%s5 + $0xc] sm:$0xf]
        %v901 = vld [vmem:[%s5 + $0x10] sm:$0xf]
        %v902 = vld [vmem:[%s5 + $0x14] sm:$0xf]
        %v903 = vld [vmem:[%s5 + $0x18] sm:$0xf]
        %v904 = vld [vmem:[%s5 + $0x1c] sm:$0xf]
        %v905 = vld [vmem:[%s5 + $0x20] sm:$0xf]
        %v906 = vld [vmem:[%s5 + $0x24] sm:$0xf]
        %v907 = vld [vmem:[%s5 + $0x28] sm:$0xf]
        %v908 = vld [vmem:[%s5 + $0x2c] sm:$0xf]
        %v909 = vld [vmem:[%s5 + $0x30] sm:$0xf]
        %v910 = vld [vmem:[%s5 + $0x34] sm:$0xf]
        %v911 = vld [vmem:[%s5 + $0x38] sm:$0xf]
        %v912 = vld [vmem:[%s5 + $0x3c] sm:$0xf]
        %v913 = vld [vmem:[%s5 + $0x40] sm:$0x1]
        %v914 = vunpack.c.l.bf16 %v913
        %916 = vrot.lane.b32.xlu0 %v896, 96
        %v917 = vpop.permute.xlu0 %916
        %920 = vrot.lane.b32.xlu0 %v407, 96
        %v921 = vpop.permute.xlu0 %920
        %v923 = vsel %vm438, %v917, %v723
        %v924 = vsel %vm767, %v923, %v921
        %v925 = vpack.c.bf16 %v924, %v924
        %v926 = vlaneseq
        %v927 = vshrl.u32 %v926, 7
        %v928 = vsub.s32 0, %v927
        %v929 = vrot.slane %v914, %v928
        %v946 = vunpack.c.l.b16 %v897
        %v947 = vunpack.c.l.b16 %v898
        %v948 = vunpack.c.l.b16 %v899
        %v949 = vunpack.c.l.b16 %v900
        %v950 = vunpack.c.l.b16 %v901
        %v951 = vunpack.c.l.b16 %v902
        %v952 = vunpack.c.l.b16 %v903
        %v953 = vunpack.c.l.b16 %v904
        %v954 = vunpack.c.l.b16 %v905
        %v955 = vunpack.c.l.b16 %v906
        %v956 = vunpack.c.l.b16 %v907
        %v957 = vunpack.c.l.b16 %v908
        %v958 = vunpack.c.l.b16 %v909
        %v959 = vunpack.c.l.b16 %v910
        %v960 = vunpack.c.l.b16 %v911
        %v961 = vunpack.c.l.b16 %v912
        %v962 = vpack.c.b16 %v947, %v946
        %v963 = vpack.c.b16 %v949, %v948
        %v964 = vpack.c.b16 %v951, %v950
        %v965 = vpack.c.b16 %v953, %v952
        %v966 = vpack.c.b16 %v955, %v954
        %v967 = vpack.c.b16 %v957, %v956
        %v968 = vpack.c.b16 %v959, %v958
        %v969 = vpack.c.b16 %v961, %v960
        %978 = vmatprep.subr.bf16.mxu0 0
        %979 = vmatpush1.bf16.msra.mxu0 %v962
        %980 = vmatprep.subr.bf16.mxu0 0
        %981 = vmatpush1.bf16.msra.mxu0 %v963
        %982 = vmatprep.subr.bf16.mxu0 0
        %983 = vmatpush1.bf16.msra.mxu0 %v964
        %984 = vmatprep.subr.bf16.mxu0 0
        %985 = vmatpush1.bf16.msra.mxu0 %v965
        %986 = vmatprep.subr.bf16.mxu0 0
        %987 = vmatpush1.bf16.msra.mxu0 %v966
        %988 = vmatprep.subr.bf16.mxu0 0
        %989 = vmatpush1.bf16.msra.mxu0 %v967
        %990 = vmatprep.subr.bf16.mxu0 0
        %991 = vmatpush1.bf16.msra.mxu0 %v968
        %992 = vmatprep.subr.bf16.mxu0 0
        %993 = vmatpush1.bf16.msra.mxu0 %v969
        %994 = vmatprep.subr.bf16.mxu0 0
        %995 = vmatpush1.bf16.msra.mxu0 0
        %996 = vmatprep.subr.bf16.mxu0 0
        %997 = vmatpush1.bf16.msra.mxu0 0
        %998 = vmatprep.subr.bf16.mxu0 0
        %999 = vmatpush1.bf16.msra.mxu0 0
        %1000 = vmatprep.subr.bf16.mxu0 0
        %1001 = vmatpush1.bf16.msra.mxu0 0
        %1002 = vmatprep.subr.bf16.mxu0 0
        %1003 = vmatpush1.bf16.msra.mxu0 0
        %1004 = vmatprep.subr.bf16.mxu0 0
        %1005 = vmatpush1.bf16.msra.mxu0 0
        %1006 = vmatprep.subr.bf16.mxu0 0
        %1007 = vmatpush1.bf16.msra.mxu0 0
        %1008 = vmatprep.subr.bf16.mxu0 0
        %1009 = vmatpush1.bf16.msra.mxu0 0
        %1010 = vmatprep.mubr.bf16.mxu0 0
        %1011 = vmatmul.mubr.bf16.gmra.mrb[0].mxu0 %v925
        %v1012 = vpop.f32.mrb[0].mxu0
        %v1013 = vadd.f32 %v929, %v1012
        %v1014 = vpop.f32.mrb[0].mxu0
        %v1015 = vpop.f32.mrb[0].mxu0
        %v1016 = vpop.f32.mrb[0].mxu0
        %1017 = vdwg.mxu0
        %1018 = vst [vmem:[%s279] sm:$0x3] %v1013
        %vm1019 = vcmask 254976
        %1020 = vst.msk [vmem:[#allocation2] sm:$0x3] %vm1019, %v917
        %v1021 = vsel %vm438, %v917, 0.0
        %1022 = vst [vmem:[#allocation7] sm:$0x3] %v1021
        %s1023 = sand.u32 %s163, 1
        %s1024 = scalar_lea.sflag [#allocation5], %s1023
        %s1025 = sand.u32 %s163, 1
        %s1026 = smul.addr %s1025, 2
        %s1027 = scalar_lea.vmem [#allocation6], %s1026
        // Predicated region
        $region53: #{tpu_custom_call.1} parent=43 // pred_check
          %p1028 = pneg %p173
        $region54: #{tpu_custom_call.1} parent=43 // pred_check_branch
          %1030 = sbr.rel (%p1028) target = $region56
        $region55: #{tpu_custom_call.1} parent=43 // pred_region
          %s1032 = ssub.s32 32, 32
          %1033 = vsyncadd %s1024, %s1032
          %s1034 = smul.addr %s24, 32
          %s1035 = scalar_lea.hbm %s6, %s1034
          %s1037 = sshll.u32 %s1027, 4
          %s1038 = int_to_ptr.vmem [resolvable:$true] %s1037
          %1040 = dma.vmem_to_hbm [thread:$0]  %s1038, 32, %s1035, %s1024
        $region56: #{tpu_custom_call.1} parent=43 // pred_fallthru
          _
        // Predicated region
        $region57: #{tpu_custom_call.1} parent=43 // pred_check
          %p1041 = pneg %p194
        $region58: #{tpu_custom_call.1} parent=43 // pred_check_branch
          %1043 = sbr.rel (%p1041) target = $region60
        $region59: #{tpu_custom_call.1} parent=43 // pred_region
          %s1045 = ssub.s32 32, 32
          %1046 = vsyncadd [#allocation8], %s1045
          %s1048 = sshll.u32 [#allocation7], 4
          %s1049 = int_to_ptr.vmem [resolvable:$true] %s1048
          %1051 = dma.vmem_to_hbm [thread:$0]  %s1049, 32, %s7, [#allocation8]
        $region60: #{tpu_custom_call.1} parent=43 // pred_fallthru
          _
        // Predicated region
        $region61: #{tpu_custom_call.1} parent=43 // pred_check
          %p1052 = pneg %p194
        $region62: #{tpu_custom_call.1} parent=43 // pred_check_branch
          %1054 = sbr.rel (%p1052) target = $region64
        $region63: #{tpu_custom_call.1} parent=43 // pred_region
          %1055 = dma.done [#allocation8], 32
        $region64: #{tpu_custom_call.1} parent=43 // pred_fallthru
          _
      $region44: #{tpu_custom_call.1} parent=5 // pred_fallthru
        _
      %p1056 = scmp.le.s32.totalorder 2, %s19
      // Predicated region
      $region65: #{tpu_custom_call.1} parent=5 // pred_check
        %p1057 = pneg %p1056
      $region66: #{tpu_custom_call.1} parent=5 // pred_check_branch
        %1059 = sbr.rel (%p1057) target = $region68
      $region67: #{tpu_custom_call.1} parent=5 // pred_region
        %s1060 = ssub.s32 %s19, 2
        // Predicated region
        $region69: #{tpu_custom_call.1} parent=67 // pred_check
          %p1061 = pneg %p179
        $region70: #{tpu_custom_call.1} parent=67 // pred_check_branch
          %1063 = sbr.rel (%p1061) target = $region72
        $region71: #{tpu_custom_call.1} parent=67 // pred_region
          %s1064 = sand.u32 %s164, 1
          %s1065 = scalar_lea.sflag [#allocation5], %s1064
          %s1066 = sand.u32 %s164, 1
          %s1067 = smul.addr %s1066, 2
          %s1068 = scalar_lea.vmem [#allocation6], %s1067
          %1069 = dma.done %s1065, 32
        $region72: #{tpu_custom_call.1} parent=67 // pred_fallthru
          _
      $region68: #{tpu_custom_call.1} parent=5 // pred_fallthru
        _
    $region6: #{tpu_custom_call.1} parent=1 // loop_footer
      %s23 = sadd.s32 1, %s19
    $region7: #{tpu_custom_call.1} parent=1 // loop_footer_branch
      %18 = sbr.rel target = $region3
    $region8: #{tpu_custom_call.1} parent=1 // loop_exit
      _
    %1070 = vsyncpa [#allocation4], 1
    %s1071 = scalar_lea.sflag [#allocation4], 1
    %1072 = vsyncpa %s1071, 1
    %1073 = vsyncpa [#allocation5], 1
    %s1074 = scalar_lea.sflag [#allocation5], 1
    %1075 = vsyncpa %s1074, 1
    %1076 = vsyncpa [#allocation8], 1

</llo_original>
